<compile_context>
chip_gen: v7x
topology: tpu7x:2x2x1
jax: 0.10.0
libtpu: 0.0.40
codegen_flags: <defaults>
</compile_context>

<pallas_src>
import jax
import jax.numpy as jnp
from jax.experimental import pallas as pl
from jax.experimental.pallas import tpu as pltpu

LEAKY_SLOPE = 0.01  # PyTorch nn.LeakyReLU default negative_slope


def bert_clf_kernel(emb_ref, mask_ref, wp_ref, bp_ref,
                    w1_ref, b1_ref, w2_ref, b2_ref, out_ref, acc_ref):
    """Fused: masked-pool accumulate -> tanh pooler -> ln1 -> LeakyReLU -> ln2.

    Grid: (batch_tiles [parallel], seq_tiles [arbitrary]).

    emb_ref  : [tB, tS, H]  bf16 token embeddings (encoder stand-in output)
    mask_ref : [tB, tS, 1]  f32 pre-normalized mask (mask / clamp(sum(mask),1))
    wp_ref   : [H, H]       pooler dense weight (in, out), f32
    bp_ref   : [1, H]
    w1_ref   : [H, HH]      ln1 weight (in, out)
    b1_ref   : [1, HH]
    w2_ref   : [HH, CP]     ln2 weight, output dim padded to CP (mult of 128)
    b2_ref   : [1, CP]
    out_ref  : [tB, CP]     lane-dense padded logits (written at last s step)
    acc_ref  : [tB, H]      f32 scratch: running masked-pool sum over S
    """
    s = pl.program_id(1)

    @pl.when(s == 0)
    def _():
        acc_ref[...] = jnp.zeros_like(acc_ref)

    # bf16 load -> f32 immediately: elementwise pool stays on the f32 VPU
    # path (works on v5e which has no bf16 VALU).  Mask is pre-normalized in
    # the wrapper, so pooling is just multiply + cross-sublane reduce.
    emb = emb_ref[...].astype(jnp.float32)            # [tB, tS, H]
    acc_ref[...] += jnp.sum(emb * mask_ref[...], axis=1)   # [tB, H] f32

    @pl.when(s == pl.num_programs(1) - 1)
    def _():
        pooled = acc_ref[...]                         # [tB, H] f32

        # BERT-style pooler: tanh(pooled @ Wp + bp) -> "pooler_output"
        pooler_out = jnp.tanh(
            jnp.dot(pooled, wp_ref[...], preferred_element_type=jnp.float32)
            + bp_ref[...])

        # Classifier head: ln2(LeakyReLU(ln1(pooler_out)))
        h = jnp.dot(pooler_out, w1_ref[...],
                    preferred_element_type=jnp.float32) + b1_ref[...]
        h = jnp.maximum(h, LEAKY_SLOPE * h)           # LeakyReLU (mul + max)
        logits = jnp.dot(h, w2_ref[...],
                         preferred_element_type=jnp.float32) + b2_ref[...]

        out_ref[...] = logits.astype(out_ref.dtype)   # full-lane store


def bert_clf_forward(tok_emb, attn_mask, params, *, tile_b=None, tile_s=None):
    """tok_emb: [B, S, H] (bf16 or f32), attn_mask: [B, S] -> logits [B, C]."""
    B, S, H = tok_emb.shape
    HH = params["w1"].shape[1]
    C = params["w2"].shape[1]
    CP = pl.cdiv(C, 128) * 128                 # lane-dense padded class dim

    # --- Tile selection -----------------------------------------------------
    # Batch: split into (at most) 2 tiles for small B so v7x can give one grid
    # step to each TensorCore; cap at 256 rows (v6e/v7x MXU height) for big B.
    if tile_b is None:
        tile_b = min(256, max(8, pl.cdiv(B, 2)))
    tile_b = ((tile_b + 7) // 8) * 8           # f32 output sublane multiple
    Bp = pl.cdiv(B, tile_b) * tile_b
    # Sequence: trailing "arbitrary" reduction axis so the emb block stays
    # well under v7x's 64 MiB VMEM at realistic sequence lengths.
    if tile_s is None:
        tile_s = min(S, 512)                   # multiple of 16 (bf16 sublane)
    Sp = pl.cdiv(S, tile_s) * tile_s

    # --- Wrapper-side prep --------------------------------------------------
    # Pre-normalized mask [B, S, 1]; padded tokens/rows get zero mask so they
    # contribute nothing to the pooled sum.
    mask = attn_mask.astype(jnp.float32)
    denom = jnp.maximum(jnp.sum(mask, axis=1, keepdims=True), 1.0)
    norm_mask = (mask / denom)[:, :, None]                       # [B, S, 1]
    w2p = jnp.pad(params["w2"], ((0, 0), (0, CP - C)))           # [HH, CP]
    b2p = jnp.pad(params["b2"], ((0, 0), (0, CP - C)))           # [1, CP]

    if (Bp, Sp) != (B, S):
        tok_emb = jnp.pad(tok_emb, ((0, Bp - B), (0, Sp - S), (0, 0)))
        norm_mask = jnp.pad(norm_mask, ((0, Bp - B), (0, Sp - S), (0, 0)))

    # --- Explicit VMEM budget (per review: don't rely on the scoped default).
    emb_bytes = tile_b * tile_s * H * tok_emb.dtype.itemsize
    mask_bytes = tile_b * tile_s * 4
    w_bytes = (H * H + H + H * HH + HH + HH * CP + CP) * 4
    out_bytes = tile_b * CP * 4
    acc_bytes = tile_b * H * 4
    needed = 2 * (emb_bytes + mask_bytes + w_bytes + out_bytes) + acc_bytes
    vmem_limit = int(min(64 * 1024 * 1024,
                         max(32 * 1024 * 1024, 2 * needed + (4 << 20))))

    const2d = lambda i, s: (0, 0)              # weights stay VMEM-resident

    out = pl.pallas_call(
        bert_clf_kernel,
        out_shape=jax.ShapeDtypeStruct((Bp, CP), jnp.float32),
        grid_spec=pltpu.PrefetchScalarGridSpec(
            num_scalar_prefetch=0,
            grid=(Bp // tile_b, Sp // tile_s),
            in_specs=[
                pl.BlockSpec((tile_b, tile_s, H), lambda i, s: (i, s, 0)),  # emb
                pl.BlockSpec((tile_b, tile_s, 1), lambda i, s: (i, s, 0)),  # mask
                pl.BlockSpec((H, H), const2d),                       # wp
                pl.BlockSpec((1, H), const2d),                       # bp
                pl.BlockSpec((H, HH), const2d),                      # w1
                pl.BlockSpec((1, HH), const2d),                      # b1
                pl.BlockSpec((HH, CP), const2d),                     # w2 (padded)
                pl.BlockSpec((1, CP), const2d),                      # b2 (padded)
            ],
            out_specs=pl.BlockSpec((tile_b, CP), lambda i, s: (i, 0)),
            scratch_shapes=[pltpu.VMEM((tile_b, H), jnp.float32)],   # pool acc
        ),
        compiler_params=pltpu.CompilerParams(
            dimension_semantics=("parallel", "arbitrary"),  # batch over 2 TCs
            vmem_limit_bytes=vmem_limit),
    )(tok_emb, norm_mask,
      params["wp"], params["bp"],
      params["w1"], params["b1"],
      w2p, b2p)

    return out[:B, :C]


def reference_forward(tok_emb, attn_mask, params):
    """Plain-JAX reference for correctness checking (same f32 math)."""
    emb = tok_emb.astype(jnp.float32)
    mask = attn_mask.astype(jnp.float32)
    denom = jnp.maximum(jnp.sum(mask, axis=1, keepdims=True), 1.0)
    pooled = jnp.sum(emb * (mask / denom)[:, :, None], axis=1)
    pooler_out = jnp.tanh(pooled @ params["wp"] + params["bp"])
    h = pooler_out @ params["w1"] + params["b1"]
    h = jnp.maximum(h, LEAKY_SLOPE * h)
    return h @ params["w2"] + params["b2"]


def init_params(key, hid_size, num_classes, vocab_size):
    ks = jax.random.split(key, 8)
    hh = hid_size // 2
    scale = 0.05
    return {
        # Embedding table stored in bf16: the [B,S,H] emb block is the
        # dominant DMA, bf16 halves its HBM->VMEM bytes.
        "embed_table": (scale * jax.random.normal(
            ks[0], (vocab_size, hid_size), jnp.float32)).astype(jnp.bfloat16),
        "wp": scale * jax.random.normal(ks[1], (hid_size, hid_size), jnp.float32),
        "bp": scale * jax.random.normal(ks[2], (1, hid_size), jnp.float32),
        "w1": scale * jax.random.normal(ks[3], (hid_size, hh), jnp.float32),
        "b1": scale * jax.random.normal(ks[4], (1, hh), jnp.float32),
        "w2": scale * jax.random.normal(ks[5], (hh, num_classes), jnp.float32),
        "b2": scale * jax.random.normal(ks[6], (1, num_classes), jnp.float32),
    }


if __name__ == "__main__":
    # Small shapes consistent with the module's forward:
    #   x: token ids [B, S], attn_mask: [B, S]; hid_size -> 256 (lane-aligned
    #   so H//2 = 128), num_classes = 12 (padded to 128 lanes internally).
    B, S, H, C, VOCAB = 16, 16, 256, 12, 64

    key = jax.random.PRNGKey(0)
    k_params, k_ids, _ = jax.random.split(key, 3)

    params = init_params(k_params, H, C, VOCAB)

    x = jax.random.randint(k_ids, (B, S), 0, VOCAB)               # token ids
    attn_mask = jnp.concatenate(
        [jnp.ones((B, S - 2), jnp.float32), jnp.zeros((B, 2), jnp.float32)],
        axis=1)                                                   # [B, S]

    # Glue: embedding gather (encoder stand-in input) stays in plain JAX.
    tok_emb = params["embed_table"][x]                            # [B,S,H] bf16

    out = bert_clf_forward(tok_emb, attn_mask, params)
    out = jax.block_until_ready(out)

    ref = reference_forward(tok_emb, attn_mask, params)
    assert out.shape == (B, C), out.shape
    assert jnp.allclose(out, ref, atol=1e-4, rtol=1e-3), "mismatch vs reference"

    print("KERNEL_OK")
</pallas_src>

<mosaic_0001>
module attributes {stable_mosaic.version = 11 : i64} {
  func.func @bert_clf_kernel(%arg0: i32, %arg1: i32, %arg2: memref<8x16x256xbf16, #tpu.memory_space<vmem>>, %arg3: memref<8x16x1xf32, #tpu.memory_space<vmem>>, %arg4: memref<256x256xf32, #tpu.memory_space<vmem>>, %arg5: memref<1x256xf32, #tpu.memory_space<vmem>>, %arg6: memref<256x128xf32, #tpu.memory_space<vmem>>, %arg7: memref<1x128xf32, #tpu.memory_space<vmem>>, %arg8: memref<128x128xf32, #tpu.memory_space<vmem>>, %arg9: memref<1x128xf32, #tpu.memory_space<vmem>>, %arg10: memref<8x128xf32, #tpu.memory_space<vmem>>, %arg11: memref<8x256xf32, #tpu.memory_space<vmem>>) attributes {dimension_semantics = [#tpu.dimension_semantics<parallel>, #tpu.dimension_semantics<arbitrary>], iteration_bounds = array<i64: 2, 1>, scalar_prefetch = 0 : i64, scratch_operands = 1 : i64, tpu.core_type = #tpu.core_type<tc>, window_params = [{transform_indices = @transform_0, window_bounds = array<i64: 8, 16, 256>}, {transform_indices = @transform_1, window_bounds = array<i64: 8, 16, 1>}, {pipeline_mode = #tpu.pipeline_mode<synchronous>, transform_indices = @transform_2, window_bounds = array<i64: 256, 256>}, {pipeline_mode = #tpu.pipeline_mode<synchronous>, transform_indices = @transform_3, window_bounds = array<i64: 1, 256>}, {pipeline_mode = #tpu.pipeline_mode<synchronous>, transform_indices = @transform_4, window_bounds = array<i64: 256, 128>}, {pipeline_mode = #tpu.pipeline_mode<synchronous>, transform_indices = @transform_5, window_bounds = array<i64: 1, 128>}, {pipeline_mode = #tpu.pipeline_mode<synchronous>, transform_indices = @transform_6, window_bounds = array<i64: 128, 128>}, {pipeline_mode = #tpu.pipeline_mode<synchronous>, transform_indices = @transform_7, window_bounds = array<i64: 1, 128>}, {transform_indices = @transform_8, window_bounds = array<i64: 8, 128>}]} {
    %c0_i32 = arith.constant 0 : i32
    %0 = arith.cmpi eq, %arg1, %c0_i32 : i32
    %1 = arith.extui %0 : i1 to i32
    %c0_i32_0 = arith.constant 0 : i32
    %2 = arith.cmpi ne, %1, %c0_i32_0 : i32
    scf.if %2 {
      %cst_12 = arith.constant 0.000000e+00 : f32
      %15 = vector.broadcast %cst_12 : f32 to vector<8x256xf32>
      %c0_13 = arith.constant 0 : index
      %c0_14 = arith.constant 0 : index
      %16 = vector.load %arg11[%c0_13, %c0_14] : memref<8x256xf32, #tpu.memory_space<vmem>>, vector<8x256xf32>
      tpu.vector_store %arg11[%c0_13, %c0_14], %15 {strides = array<i32>} : memref<8x256xf32, #tpu.memory_space<vmem>>, vector<8x256xf32>,
    } else {
    }
    %c0 = arith.constant 0 : index
    %c0_1 = arith.constant 0 : index
    %c0_2 = arith.constant 0 : index
    %3 = vector.load %arg2[%c0, %c0_1, %c0_2] : memref<8x16x256xbf16, #tpu.memory_space<vmem>>, vector<8x16x256xbf16>
    %4 = arith.extf %3 : vector<8x16x256xbf16> to vector<8x16x256xf32>
    %c0_3 = arith.constant 0 : index
    %c0_4 = arith.constant 0 : index
    %5 = vector.load %arg11[%c0_3, %c0_4] : memref<8x256xf32, #tpu.memory_space<vmem>>, vector<8x256xf32>
    %c0_5 = arith.constant 0 : index
    %c0_6 = arith.constant 0 : index
    %c0_7 = arith.constant 0 : index
    %6 = vector.load %arg3[%c0_5, %c0_6, %c0_7] : memref<8x16x1xf32, #tpu.memory_space<vmem>>, vector<8x16x1xf32>
    %7 = vector.broadcast %6 : vector<8x16x1xf32> to vector<8x16x256xf32>
    %8 = arith.mulf %4, %7 : vector<8x16x256xf32>
    %cst = arith.constant dense<0.000000e+00> : vector<8x256xf32>
    %9 = vector.multi_reduction <add>, %8, %cst [1] : vector<8x16x256xf32> to vector<8x256xf32>
    %10 = arith.addf %5, %9 : vector<8x256xf32>
    %c0_8 = arith.constant 0 : index
    %c0_9 = arith.constant 0 : index
    %11 = vector.load %arg11[%c0_8, %c0_9] : memref<8x256xf32, #tpu.memory_space<vmem>>, vector<8x256xf32>
    tpu.vector_store %arg11[%c0_8, %c0_9], %10 {strides = array<i32>} : memref<8x256xf32, #tpu.memory_space<vmem>>, vector<8x256xf32>,
    %c0_i32_10 = arith.constant 0 : i32
    %12 = arith.cmpi eq, %arg1, %c0_i32_10 : i32
    %13 = arith.extui %12 : i1 to i32
    %c0_i32_11 = arith.constant 0 : i32
    %14 = arith.cmpi ne, %13, %c0_i32_11 : i32
    scf.if %14 {
      %c0_12 = arith.constant 0 : index
      %c0_13 = arith.constant 0 : index
      %15 = vector.load %arg11[%c0_12, %c0_13] : memref<8x256xf32, #tpu.memory_space<vmem>>, vector<8x256xf32>
      %c0_14 = arith.constant 0 : index
      %c0_15 = arith.constant 0 : index
      %16 = vector.load %arg4[%c0_14, %c0_15] : memref<256x256xf32, #tpu.memory_space<vmem>>, vector<256x256xf32>
      %cst_16 = arith.constant dense<0.000000e+00> : vector<8x256xf32>
      %17 = tpu.matmul %15, %16, %cst_16 {dimension_numbers = #tpu.dot_dimension_numbers<[1], [0], [0], [1], [0, 0, 1, 1], [], []>} : vector<8x256xf32>, vector<256x256xf32>, vector<8x256xf32> -> vector<8x256xf32>
      %c0_17 = arith.constant 0 : index
      %c0_18 = arith.constant 0 : index
      %18 = vector.load %arg5[%c0_17, %c0_18] : memref<1x256xf32, #tpu.memory_space<vmem>>, vector<1x256xf32>
      %19 = vector.broadcast %18 : vector<1x256xf32> to vector<8x256xf32>
      %20 = arith.addf %17, %19 : vector<8x256xf32>
      %21 = math.tanh %20 : vector<8x256xf32>
      %c0_19 = arith.constant 0 : index
      %c0_20 = arith.constant 0 : index
      %22 = vector.load %arg6[%c0_19, %c0_20] : memref<256x128xf32, #tpu.memory_space<vmem>>, vector<256x128xf32>
      %cst_21 = arith.constant dense<0.000000e+00> : vector<8x128xf32>
      %23 = tpu.matmul %21, %22, %cst_21 {dimension_numbers = #tpu.dot_dimension_numbers<[1], [0], [0], [1], [0, 0, 1, 1], [], []>} : vector<8x256xf32>, vector<256x128xf32>, vector<8x128xf32> -> vector<8x128xf32>
      %c0_22 = arith.constant 0 : index
      %c0_23 = arith.constant 0 : index
      %24 = vector.load %arg7[%c0_22, %c0_23] : memref<1x128xf32, #tpu.memory_space<vmem>>, vector<1x128xf32>
      %25 = vector.broadcast %24 : vector<1x128xf32> to vector<8x128xf32>
      %26 = arith.addf %23, %25 : vector<8x128xf32>
      %cst_24 = arith.constant 0.00999999977 : f32
      %27 = vector.broadcast %cst_24 : f32 to vector<8x128xf32>
      %28 = arith.mulf %27, %26 : vector<8x128xf32>
      %29 = arith.maximumf %26, %28 : vector<8x128xf32>
      %c0_25 = arith.constant 0 : index
      %c0_26 = arith.constant 0 : index
      %30 = vector.load %arg8[%c0_25, %c0_26] : memref<128x128xf32, #tpu.memory_space<vmem>>, vector<128x128xf32>
      %cst_27 = arith.constant dense<0.000000e+00> : vector<8x128xf32>
      %31 = tpu.matmul %29, %30, %cst_27 {dimension_numbers = #tpu.dot_dimension_numbers<[1], [0], [0], [1], [0, 0, 1, 1], [], []>} : vector<8x128xf32>, vector<128x128xf32>, vector<8x128xf32> -> vector<8x128xf32>
      %c0_28 = arith.constant 0 : index
      %c0_29 = arith.constant 0 : index
      %32 = vector.load %arg9[%c0_28, %c0_29] : memref<1x128xf32, #tpu.memory_space<vmem>>, vector<1x128xf32>
      %33 = vector.broadcast %32 : vector<1x128xf32> to vector<8x128xf32>
      %34 = arith.addf %31, %33 : vector<8x128xf32>
      %c0_30 = arith.constant 0 : index
      %c0_31 = arith.constant 0 : index
      %35 = vector.load %arg10[%c0_30, %c0_31] : memref<8x128xf32, #tpu.memory_space<vmem>>, vector<8x128xf32>
      tpu.vector_store %arg10[%c0_30, %c0_31], %34 {strides = array<i32>} : memref<8x128xf32, #tpu.memory_space<vmem>>, vector<8x128xf32>,
    } else {
    }
    return
  }
  func.func @transform_0(%arg0: i32, %arg1: i32) -> (i32, i32, i32) {
    %c0_i32 = arith.constant 0 : i32
    %c0_i32_0 = arith.constant 0 : i32
    return %arg0, %arg1, %c0_i32 : i32, i32, i32
  }
  func.func @transform_1(%arg0: i32, %arg1: i32) -> (i32, i32, i32) {
    %c0_i32 = arith.constant 0 : i32
    %c0_i32_0 = arith.constant 0 : i32
    return %arg0, %arg1, %c0_i32 : i32, i32, i32
  }
  func.func @transform_2(%arg0: i32, %arg1: i32) -> (i32, i32) {
    %c0_i32 = arith.constant 0 : i32
    %c0_i32_0 = arith.constant 0 : i32
    %c0_i32_1 = arith.constant 0 : i32
    return %c0_i32, %c0_i32_0 : i32, i32
  }
  func.func @transform_3(%arg0: i32, %arg1: i32) -> (i32, i32) {
    %c0_i32 = arith.constant 0 : i32
    %c0_i32_0 = arith.constant 0 : i32
    %c0_i32_1 = arith.constant 0 : i32
    return %c0_i32, %c0_i32_0 : i32, i32
  }
  func.func @transform_4(%arg0: i32, %arg1: i32) -> (i32, i32) {
    %c0_i32 = arith.constant 0 : i32
    %c0_i32_0 = arith.constant 0 : i32
    %c0_i32_1 = arith.constant 0 : i32
    return %c0_i32, %c0_i32_0 : i32, i32
  }
  func.func @transform_5(%arg0: i32, %arg1: i32) -> (i32, i32) {
    %c0_i32 = arith.constant 0 : i32
    %c0_i32_0 = arith.constant 0 : i32
    %c0_i32_1 = arith.constant 0 : i32
    return %c0_i32, %c0_i32_0 : i32, i32
  }
  func.func @transform_6(%arg0: i32, %arg1: i32) -> (i32, i32) {
    %c0_i32 = arith.constant 0 : i32
    %c0_i32_0 = arith.constant 0 : i32
    %c0_i32_1 = arith.constant 0 : i32
    return %c0_i32, %c0_i32_0 : i32, i32
  }
  func.func @transform_7(%arg0: i32, %arg1: i32) -> (i32, i32) {
    %c0_i32 = arith.constant 0 : i32
    %c0_i32_0 = arith.constant 0 : i32
    %c0_i32_1 = arith.constant 0 : i32
    return %c0_i32, %c0_i32_0 : i32, i32
  }
  func.func @transform_8(%arg0: i32, %arg1: i32) -> (i32, i32) {
    %c0_i32 = arith.constant 0 : i32
    %c0_i32_0 = arith.constant 0 : i32
    return %arg0, %c0_i32 : i32, i32
  }
}

</mosaic_0001>

<llo_original>
// kernel: tpu_custom_call.1
$region0: #{tpu_custom_call.1}
  #allocation0 [shape = 'u32[]', space=smem, size = 0x4, offset = 0x4, fixed_abs, tag = 'smem constant byte address 0x4 - core index']
  #allocation1 [shape = 'u32[144,128]{1,0:T(1,128)}', space=vmem, size = 0x12000, scoped, tag = 'internal scratch']
  #allocation2 [shape = 'f32[8,256]{1,0:T(8,128)}', space=vmem, size = 0x2000, scoped, tag = 'scratch operand']
  %s0 = inlined_call_operand.vmem [shape: bf16[16,16,256], index: 0, kind: input, shape index: {}]
  %s1 = inlined_call_operand.vmem [shape: f32[16,16,1], index: 1, kind: input, shape index: {}]
  %s2 = inlined_call_operand.hbm [shape: f32[256,256], index: 2, kind: input, shape index: {}]
  %s3 = inlined_call_operand.vmem [shape: f32[1,256], index: 3, kind: input, shape index: {}]
  %s4 = inlined_call_operand.hbm [shape: f32[256,128], index: 4, kind: input, shape index: {}]
  %s5 = inlined_call_operand.vmem [shape: f32[1,128], index: 5, kind: input, shape index: {}]
  %s6 = inlined_call_operand.hbm [shape: f32[128,128], index: 6, kind: input, shape index: {}]
  %s7 = inlined_call_operand.vmem [shape: f32[1,128], index: 7, kind: input, shape index: {}]
  %s8 = inlined_call_operand.hbm [shape: f32[16,128], index: 8, kind: output, shape index: {}]
  %s9 = sld [smem:[#allocation0]]
  $region85: #{tpu_custom_call.1} parent=0
    _
  %s11 = ssub.s32 1, %s9
  %s12 = scalar_select 0, %s11, %s9
  $region1: #{tpu_custom_call.1} parent=0
    #allocation3 [shape = 'u8[262144]{0}', space=vmem, size = 0x40000, scoped, tag = 'input window, operand 2, single buffered']
    #allocation4 [shape = 's32[2]{0}', space=sflag, size = 0x8, scoped, tag = 'scoped memory for tpu_custom_call.1']
    #allocation5 [shape = 's32[2]{0}', space=sflag, size = 0x8, scoped, tag = 'scoped memory for tpu_custom_call.1']
    #allocation6 [shape = 'u8[131072]{0}', space=vmem, size = 0x20000, scoped, tag = 'input window, operand 4, single buffered']
    #allocation7 [shape = 's32[1]{0}', space=sflag, size = 0x4, scoped, tag = 'scoped memory for tpu_custom_call.1']
    #allocation8 [shape = 'u8[65536]{0}', space=vmem, size = 0x10000, scoped, tag = 'input window, operand 6, single buffered']
    #allocation9 [shape = 'u8[8192]{0}', space=vmem, size = 0x2000, scoped, tag = 'output window, operand 0']
    %13 = vsyncpa [#allocation4], 0
    %14 = vsyncpa [#allocation7], 0
    %15 = vsyncpa [#allocation5], 0
    %s16 = scalar_lea.sflag [#allocation5], 1
    %17 = vsyncpa %s16, 0
    loop: start=0, step=1, limit=4
    $region2: #{tpu_custom_call.1} parent=1 // loop_pre_header
      _
    $region3: #{tpu_custom_call.1} parent=1 // loop_header
      %s19 = sphi 0, %s23
      %p20 = scmp.ge.s32.totalorder %s19, 4
      %s26 = sphi 0, %s38
      %s27 = sphi 0, %s34
      %s28 = sphi 0, %s26
      %s29 = sphi 0, %s27
      %s30 = sphi 0, %s28
      %s31 = sphi 0, %s29
      %s43 = sphi 0, %s45
      %s46 = sphi 0, %s43
      %s47 = sphi 0, %s46
      %s63 = sphi 0, %s47
      %s71 = sphi 0, %s73
      %s74 = sphi 0, %s71
      %s75 = sphi 0, %s74
      %s91 = sphi 0, %s75
      %s95 = sphi 0, %s95
      %s97 = sphi 0, %s95
      %s98 = sphi 0, %s97
      %s112 = sphi 0, %s98
      %s116 = sphi 0, %s116
      %s118 = sphi 0, %s116
      %s119 = sphi 0, %s118
      %s133 = sphi 0, %s119
      %s137 = sphi 0, %s137
      %s139 = sphi 0, %s137
      %s140 = sphi 0, %s139
      %s154 = sphi 0, %s140
      %s158 = sphi 0, %s158
      %s160 = sphi 0, %s158
      %s161 = sphi 0, %s160
      %s175 = sphi 0, %s161
      %s179 = sphi 0, %s179
      %s181 = sphi 0, %s179
      %s182 = sphi 0, %s181
      %s196 = sphi 0, %s182
      %s200 = sphi 0, %s200
      %s202 = sphi 0, %s200
      %s203 = sphi 0, %s202
      %s217 = sphi 0, %s203
      %s223 = sphi 0, %s225
      %s226 = sphi 0, %s223
      %s227 = sphi 0, %s226
      %s243 = sphi 0, %s227
    $region4: #{tpu_custom_call.1} parent=1 // loop_header_branch
      %22 = sbr.rel (%p20) target = $region8
    $region5: #{tpu_custom_call.1} parent=1 // loop_body
      %s24 = ssub.s32 %s19, 1
      %s25 = ssub.s32 %s19, 2
      %s32 = sadd.s32 1, %s27
      %p33 = scmp.ge.s32.totalorder %s32, 1
      %s34 = scalar_select %p33, 0, %s32
      %s35 = sadd.s32 1, %s26
      %s36 = scalar_select %p33, %s35, %s26
      %p37 = scmp.ge.s32.totalorder %s36, 2
      %s38 = scalar_select %p37, 0, %s36
      %s39 = ssub.s32 %s26, %s38
      %s40 = ssub.s32 %s27, %s34
      %s41 = sor.u32 %s39, %s40
      %p42 = scmp.eq.s32.totalorder %s41, 0
      %s44 = sadd.s32 %s43, 1
      %s45 = scalar_select %p42, %s43, %s44
      %p48 = pneg %p42
      %p49 = scmp.eq.s32.totalorder %s19, 1
      %p50 = por %p48, %p49
      %p51 = scmp.ne.s32.totalorder %s43, %s46
      %p52 = scmp.eq.s32.totalorder %s19, 0
      %p53 = por %p51, %p52
      %p54 = scmp.ne.s32.totalorder %s43, %s46
      %p55 = scmp.eq.s32.totalorder %s24, 1
      %p56 = por %p54, %p55
      %p57 = scmp.ne.s32.totalorder %s46, %s47
      %p58 = scmp.eq.s32.totalorder %s24, 0
      %p59 = por %p57, %p58
      %p60 = scmp.ne.s32.totalorder %s46, %s47
      %p61 = scmp.eq.s32.totalorder %s25, 1
      %p62 = por %p60, %p61
      %p64 = scmp.ne.s32.totalorder %s47, %s63
      %p65 = scmp.eq.s32.totalorder %s25, 0
      %p66 = por %p64, %p65
      %s67 = ssub.s32 %s26, %s38
      %s68 = ssub.s32 %s27, %s34
      %s69 = sor.u32 %s67, %s68
      %p70 = scmp.eq.s32.totalorder %s69, 0
      %s72 = sadd.s32 %s71, 1
      %s73 = scalar_select %p70, %s71, %s72
      %p76 = pneg %p70
      %p77 = scmp.eq.s32.totalorder %s19, 1
      %p78 = por %p76, %p77
      %p79 = scmp.ne.s32.totalorder %s71, %s74
      %p80 = scmp.eq.s32.totalorder %s19, 0
      %p81 = por %p79, %p80
      %p82 = scmp.ne.s32.totalorder %s71, %s74
      %p83 = scmp.eq.s32.totalorder %s24, 1
      %p84 = por %p82, %p83
      %p85 = scmp.ne.s32.totalorder %s74, %s75
      %p86 = scmp.eq.s32.totalorder %s24, 0
      %p87 = por %p85, %p86
      %p88 = scmp.ne.s32.totalorder %s74, %s75
      %p89 = scmp.eq.s32.totalorder %s25, 1
      %p90 = por %p88, %p89
      %p92 = scmp.ne.s32.totalorder %s75, %s91
      %p93 = scmp.eq.s32.totalorder %s25, 0
      %p94 = por %p92, %p93
      %s96 = sadd.s32 %s95, 1
      %p99 = scmp.eq.s32.totalorder %s19, 1
      %p100 = scmp.ne.s32.totalorder %s95, %s97
      %p101 = scmp.eq.s32.totalorder %s19, 0
      %p102 = por %p100, %p101
      %p103 = scmp.ne.s32.totalorder %s95, %s97
      %p104 = scmp.eq.s32.totalorder %s24, 1
      %p105 = por %p103, %p104
      %p106 = scmp.ne.s32.totalorder %s97, %s98
      %p107 = scmp.eq.s32.totalorder %s24, 0
      %p108 = por %p106, %p107
      %p109 = scmp.ne.s32.totalorder %s97, %s98
      %p110 = scmp.eq.s32.totalorder %s25, 1
      %p111 = por %p109, %p110
      %p113 = scmp.ne.s32.totalorder %s98, %s112
      %p114 = scmp.eq.s32.totalorder %s25, 0
      %p115 = por %p113, %p114
      %s117 = sadd.s32 %s116, 1
      %p120 = scmp.eq.s32.totalorder %s19, 1
      %p121 = scmp.ne.s32.totalorder %s116, %s118
      %p122 = scmp.eq.s32.totalorder %s19, 0
      %p123 = por %p121, %p122
      %p124 = scmp.ne.s32.totalorder %s116, %s118
      %p125 = scmp.eq.s32.totalorder %s24, 1
      %p126 = por %p124, %p125
      %p127 = scmp.ne.s32.totalorder %s118, %s119
      %p128 = scmp.eq.s32.totalorder %s24, 0
      %p129 = por %p127, %p128
      %p130 = scmp.ne.s32.totalorder %s118, %s119
      %p131 = scmp.eq.s32.totalorder %s25, 1
      %p132 = por %p130, %p131
      %p134 = scmp.ne.s32.totalorder %s119, %s133
      %p135 = scmp.eq.s32.totalorder %s25, 0
      %p136 = por %p134, %p135
      %s138 = sadd.s32 %s137, 1
      %p141 = scmp.eq.s32.totalorder %s19, 1
      %p142 = scmp.ne.s32.totalorder %s137, %s139
      %p143 = scmp.eq.s32.totalorder %s19, 0
      %p144 = por %p142, %p143
      %p145 = scmp.ne.s32.totalorder %s137, %s139
      %p146 = scmp.eq.s32.totalorder %s24, 1
      %p147 = por %p145, %p146
      %p148 = scmp.ne.s32.totalorder %s139, %s140
      %p149 = scmp.eq.s32.totalorder %s24, 0
      %p150 = por %p148, %p149
      %p151 = scmp.ne.s32.totalorder %s139, %s140
      %p152 = scmp.eq.s32.totalorder %s25, 1
      %p153 = por %p151, %p152
      %p155 = scmp.ne.s32.totalorder %s140, %s154
      %p156 = scmp.eq.s32.totalorder %s25, 0
      %p157 = por %p155, %p156
      %s159 = sadd.s32 %s158, 1
      %p162 = scmp.eq.s32.totalorder %s19, 1
      %p163 = scmp.ne.s32.totalorder %s158, %s160
      %p164 = scmp.eq.s32.totalorder %s19, 0
      %p165 = por %p163, %p164
      %p166 = scmp.ne.s32.totalorder %s158, %s160
      %p167 = scmp.eq.s32.totalorder %s24, 1
      %p168 = por %p166, %p167
      %p169 = scmp.ne.s32.totalorder %s160, %s161
      %p170 = scmp.eq.s32.totalorder %s24, 0
      %p171 = por %p169, %p170
      %p172 = scmp.ne.s32.totalorder %s160, %s161
      %p173 = scmp.eq.s32.totalorder %s25, 1
      %p174 = por %p172, %p173
      %p176 = scmp.ne.s32.totalorder %s161, %s175
      %p177 = scmp.eq.s32.totalorder %s25, 0
      %p178 = por %p176, %p177
      %s180 = sadd.s32 %s179, 1
      %p183 = scmp.eq.s32.totalorder %s19, 1
      %p184 = scmp.ne.s32.totalorder %s179, %s181
      %p185 = scmp.eq.s32.totalorder %s19, 0
      %p186 = por %p184, %p185
      %p187 = scmp.ne.s32.totalorder %s179, %s181
      %p188 = scmp.eq.s32.totalorder %s24, 1
      %p189 = por %p187, %p188
      %p190 = scmp.ne.s32.totalorder %s181, %s182
      %p191 = scmp.eq.s32.totalorder %s24, 0
      %p192 = por %p190, %p191
      %p193 = scmp.ne.s32.totalorder %s181, %s182
      %p194 = scmp.eq.s32.totalorder %s25, 1
      %p195 = por %p193, %p194
      %p197 = scmp.ne.s32.totalorder %s182, %s196
      %p198 = scmp.eq.s32.totalorder %s25, 0
      %p199 = por %p197, %p198
      %s201 = sadd.s32 %s200, 1
      %p204 = scmp.eq.s32.totalorder %s19, 1
      %p205 = scmp.ne.s32.totalorder %s200, %s202
      %p206 = scmp.eq.s32.totalorder %s19, 0
      %p207 = por %p205, %p206
      %p208 = scmp.ne.s32.totalorder %s200, %s202
      %p209 = scmp.eq.s32.totalorder %s24, 1
      %p210 = por %p208, %p209
      %p211 = scmp.ne.s32.totalorder %s202, %s203
      %p212 = scmp.eq.s32.totalorder %s24, 0
      %p213 = por %p211, %p212
      %p214 = scmp.ne.s32.totalorder %s202, %s203
      %p215 = scmp.eq.s32.totalorder %s25, 1
      %p216 = por %p214, %p215
      %p218 = scmp.ne.s32.totalorder %s203, %s217
      %p219 = scmp.eq.s32.totalorder %s25, 0
      %p220 = por %p218, %p219
      %s221 = ssub.s32 %s26, %s38
      %p222 = scmp.eq.s32.totalorder %s221, 0
      %s224 = sadd.s32 %s223, 1
      %s225 = scalar_select %p222, %s223, %s224
      %p228 = pneg %p222
      %p229 = scmp.eq.s32.totalorder %s19, 1
      %p230 = por %p228, %p229
      %p231 = scmp.ne.s32.totalorder %s223, %s226
      %p232 = scmp.eq.s32.totalorder %s19, 0
      %p233 = por %p231, %p232
      %p234 = scmp.ne.s32.totalorder %s223, %s226
      %p235 = scmp.eq.s32.totalorder %s24, 1
      %p236 = por %p234, %p235
      %p237 = scmp.ne.s32.totalorder %s226, %s227
      %p238 = scmp.eq.s32.totalorder %s24, 0
      %p239 = por %p237, %p238
      %p240 = scmp.ne.s32.totalorder %s226, %s227
      %p241 = scmp.eq.s32.totalorder %s25, 1
      %p242 = por %p240, %p241
      %p244 = scmp.ne.s32.totalorder %s227, %s243
      %p245 = scmp.eq.s32.totalorder %s25, 0
      %p246 = por %p244, %p245
      %p247 = scmp.le.s32.totalorder 1, %s19
      %p248 = scmp.lt.s32.totalorder %s19, 3
      %p249 = pnand %p247, %p248
      %p250 = pneg %p249
      // Predicated region
      $region9: #{tpu_custom_call.1} parent=5 // pred_check
        _
      $region10: #{tpu_custom_call.1} parent=5 // pred_check_branch
        %252 = sbr.rel (%p249) target = $region12
      $region11: #{tpu_custom_call.1} parent=5 // pred_region
        %s253 = ssub.s32 %s19, 1
        // Predicated region
        $region13: #{tpu_custom_call.1} parent=11 // pred_check
          %p254 = pneg %p108
        $region14: #{tpu_custom_call.1} parent=11 // pred_check_branch
          %256 = sbr.rel (%p254) target = $region16
        $region15: #{tpu_custom_call.1} parent=11 // pred_region
          %s258 = ssub.s32 8192, 8192
          %259 = vsyncadd [#allocation4], %s258
          %s260 = sshll.u32 [#allocation3], 4
          %s261 = int_to_ptr.vmem [resolvable:$true] %s260
          %266 = dma.hbm_to_vmem [thread:$0]  %s2, 8192, %s261, [#allocation4], 256, 256, 16
        $region16: #{tpu_custom_call.1} parent=11 // pred_fallthru
          _
        // Predicated region
        $region17: #{tpu_custom_call.1} parent=11 // pred_check
          %p267 = pneg %p129
        $region18: #{tpu_custom_call.1} parent=11 // pred_check_branch
          %269 = sbr.rel (%p267) target = $region20
        $region19: #{tpu_custom_call.1} parent=11 // pred_region
          _
        $region20: #{tpu_custom_call.1} parent=11 // pred_fallthru
          _
        // Predicated region
        $region21: #{tpu_custom_call.1} parent=11 // pred_check
          %p270 = pneg %p150
        $region22: #{tpu_custom_call.1} parent=11 // pred_check_branch
          %272 = sbr.rel (%p270) target = $region24
        $region23: #{tpu_custom_call.1} parent=11 // pred_region
          %s274 = ssub.s32 4096, 4096
          %275 = vsyncadd [#allocation7], %s274
          %s276 = sshll.u32 [#allocation6], 4
          %s277 = int_to_ptr.vmem [resolvable:$true] %s276
          %282 = dma.hbm_to_vmem [thread:$0]  %s4, 4096, %s277, [#allocation7], 128, 128, 8
        $region24: #{tpu_custom_call.1} parent=11 // pred_fallthru
          _
        // Predicated region
        $region25: #{tpu_custom_call.1} parent=11 // pred_check
          %p283 = pneg %p171
        $region26: #{tpu_custom_call.1} parent=11 // pred_check_branch
          %285 = sbr.rel (%p283) target = $region28
        $region27: #{tpu_custom_call.1} parent=11 // pred_region
          _
        $region28: #{tpu_custom_call.1} parent=11 // pred_fallthru
          _
        // Predicated region
        $region29: #{tpu_custom_call.1} parent=11 // pred_check
          %p286 = pneg %p192
        $region30: #{tpu_custom_call.1} parent=11 // pred_check_branch
          %288 = sbr.rel (%p286) target = $region32
        $region31: #{tpu_custom_call.1} parent=11 // pred_region
          %s290 = ssub.s32 2048, 2048
          %291 = vsyncadd [#allocation7], %s290
          %s292 = sshll.u32 [#allocation8], 4
          %s293 = int_to_ptr.vmem [resolvable:$true] %s292
          %298 = dma.hbm_to_vmem [thread:$0]  %s6, 2048, %s293, [#allocation7], 128, 128, 8
        $region32: #{tpu_custom_call.1} parent=11 // pred_fallthru
          _
        // Predicated region
        $region33: #{tpu_custom_call.1} parent=11 // pred_check
          %p299 = pneg %p213
        $region34: #{tpu_custom_call.1} parent=11 // pred_check_branch
          %301 = sbr.rel (%p299) target = $region36
        $region35: #{tpu_custom_call.1} parent=11 // pred_region
          _
        $region36: #{tpu_custom_call.1} parent=11 // pred_fallthru
          _
      $region12: #{tpu_custom_call.1} parent=5 // pred_fallthru
        _
      %p302 = scmp.lt.s32.totalorder %s19, 2
      // Predicated region
      $region37: #{tpu_custom_call.1} parent=5 // pred_check
        %p303 = pneg %p302
      $region38: #{tpu_custom_call.1} parent=5 // pred_check_branch
        %305 = sbr.rel (%p303) target = $region40
      $region39: #{tpu_custom_call.1} parent=5 // pred_region
        // Predicated region
        $region41: #{tpu_custom_call.1} parent=39 // pred_check
          %p306 = pneg %p53
        $region42: #{tpu_custom_call.1} parent=39 // pred_check_branch
          %308 = sbr.rel (%p306) target = $region44
        $region43: #{tpu_custom_call.1} parent=39 // pred_region
          %s309 = smul.u32 8, %s26
          %s310 = smul.u32 2, %s27
          %p311 = scmp.lt.s32.totalorder %s309, 15
          %s312 = scalar_select %p311, %s309, 15
          %p313 = scmp.lt.s32.totalorder %s310, 1
          %s314 = scalar_select %p313, %s310, 1
          %s315 = smul.addr %s314, 2
          %s316 = smul.addr %s312, 4
          %s317 = sadd.s32 %s315, %s316
          %s318 = smul.addr %s317, 4
          %s319 = scalar_lea.vmem %s0, %s318
          %s320 = smul.u32 8, %s26
          %s321 = smul.u32 2, %s27
        $region44: #{tpu_custom_call.1} parent=39 // pred_fallthru
          _
        // Predicated region
        $region45: #{tpu_custom_call.1} parent=39 // pred_check
          %p322 = pneg %p81
        $region46: #{tpu_custom_call.1} parent=39 // pred_check_branch
          %324 = sbr.rel (%p322) target = $region48
        $region47: #{tpu_custom_call.1} parent=39 // pred_region
          %s325 = smul.u32 8, %s26
          %s326 = smul.u32 2, %s27
          %p327 = scmp.lt.s32.totalorder %s325, 15
          %s328 = scalar_select %p327, %s325, 15
          %p329 = scmp.lt.s32.totalorder %s326, 1
          %s330 = scalar_select %p329, %s326, 1
          %s331 = smul.addr %s328, 2
          %s332 = sadd.s32 %s330, %s331
          %s333 = smul.addr %s332, 8
          %s334 = scalar_lea.vmem %s1, %s333
          %s335 = smul.u32 8, %s26
          %s336 = smul.u32 2, %s27
        $region48: #{tpu_custom_call.1} parent=39 // pred_fallthru
          _
      $region40: #{tpu_custom_call.1} parent=5 // pred_fallthru
        _
      %p337 = scmp.le.s32.totalorder 1, %s19
      %p338 = scmp.lt.s32.totalorder %s19, 3
      %p339 = pnand %p337, %p338
      %p340 = pneg %p339
      // Predicated region
      $region49: #{tpu_custom_call.1} parent=5 // pred_check
        _
      $region50: #{tpu_custom_call.1} parent=5 // pred_check_branch
        %342 = sbr.rel (%p339) target = $region52
      $region51: #{tpu_custom_call.1} parent=5 // pred_region
        %s343 = ssub.s32 %s19, 1
        // Predicated region
        $region53: #{tpu_custom_call.1} parent=51 // pred_check
          %p344 = pneg %p108
        $region54: #{tpu_custom_call.1} parent=51 // pred_check_branch
          %346 = sbr.rel (%p344) target = $region56
        $region55: #{tpu_custom_call.1} parent=51 // pred_region
          %347 = dma.done [#allocation4], 8192
        $region56: #{tpu_custom_call.1} parent=51 // pred_fallthru
          _
        // Predicated region
        $region57: #{tpu_custom_call.1} parent=51 // pred_check
          %p348 = pneg %p150
        $region58: #{tpu_custom_call.1} parent=51 // pred_check_branch
          %350 = sbr.rel (%p348) target = $region60
        $region59: #{tpu_custom_call.1} parent=51 // pred_region
          %351 = dma.done [#allocation7], 4096
        $region60: #{tpu_custom_call.1} parent=51 // pred_fallthru
          _
        // Predicated region
        $region61: #{tpu_custom_call.1} parent=51 // pred_check
          %p352 = pneg %p192
        $region62: #{tpu_custom_call.1} parent=51 // pred_check_branch
          %354 = sbr.rel (%p352) target = $region64
        $region63: #{tpu_custom_call.1} parent=51 // pred_region
          %355 = dma.done [#allocation7], 2048
        $region64: #{tpu_custom_call.1} parent=51 // pred_fallthru
          _
        %s356 = smul.u32 8, %s28
        %s357 = smul.u32 2, %s29
        %p358 = scmp.lt.s32.totalorder %s356, 15
        %s359 = scalar_select %p358, %s356, 15
        %p360 = scmp.lt.s32.totalorder %s357, 1
        %s361 = scalar_select %p360, %s357, 1
        %s362 = smul.addr %s361, 2
        %s363 = smul.addr %s359, 4
        %s364 = sadd.s32 %s362, %s363
        %s365 = smul.addr %s364, 4
        %s366 = scalar_lea.vmem %s0, %s365
        %p367 = pneg %p59
        %p368 = pneg %p56
        %s369 = smul.u32 8, %s28
        %s370 = smul.u32 2, %s29
        %p371 = scmp.lt.s32.totalorder %s369, 15
        %s372 = scalar_select %p371, %s369, 15
        %p373 = scmp.lt.s32.totalorder %s370, 1
        %s374 = scalar_select %p373, %s370, 1
        %s375 = smul.addr %s372, 2
        %s376 = sadd.s32 %s374, %s375
        %s377 = smul.addr %s376, 8
        %s378 = scalar_lea.vmem %s1, %s377
        %p379 = pneg %p87
        %p380 = pneg %p84
        %p381 = pneg %p108
        %p382 = pneg %p105
        %p383 = pneg %p129
        %p384 = pneg %p126
        %p385 = pneg %p150
        %p386 = pneg %p147
        %p387 = pneg %p171
        %p388 = pneg %p168
        %p389 = pneg %p192
        %p390 = pneg %p189
        %p391 = pneg %p213
        %p392 = pneg %p210
        %p393 = pneg %p239
        %p394 = pneg %p236
        %s395 = sand.u32 %s226, 1
        %s396 = scalar_lea.sflag [#allocation5], %s395
        %s397 = sand.u32 %s226, 1
        %s398 = smul.addr %s397, 8
        %s399 = scalar_lea.vmem [#allocation9], %s398
        %s400 = smul.u32 8, %s28
        %s401 = smul.u32 2, %s29
        %p402 = scmp.lt.s32.totalorder %s400, 15
        %s403 = scalar_select %p402, %s400, 15
        %p404 = scmp.lt.s32.totalorder %s401, 1
        %s405 = scalar_select %p404, %s401, 1
        %s406 = smul.addr %s405, 2
        %s407 = smul.addr %s403, 4
        %s408 = sadd.s32 %s406, %s407
        %s409 = smul.addr %s408, 4
        %s410 = scalar_lea.vmem %s0, %s409
        %s411 = smul.u32 8, %s28
        %s412 = smul.u32 2, %s29
        %s413 = smul.u32 8, %s28
        %s414 = smul.u32 2, %s29
        %p415 = scmp.lt.s32.totalorder %s413, 15
        %s416 = scalar_select %p415, %s413, 15
        %p417 = scmp.lt.s32.totalorder %s414, 1
        %s418 = scalar_select %p417, %s414, 1
        %s419 = smul.addr %s416, 2
        %s420 = sadd.s32 %s418, %s419
        %s421 = smul.addr %s420, 8
        %s422 = scalar_lea.vmem %s1, %s421
        %s423 = smul.u32 8, %s28
        %s424 = smul.u32 2, %s29
        %p425 = scmp.eq.s32.totalorder %s29, 0
        // Predicated region
        $region65: #{tpu_custom_call.1} parent=51 // pred_check
          %p426 = pneg %p425
        $region66: #{tpu_custom_call.1} parent=51 // pred_check_branch
          %428 = sbr.rel (%p426) target = $region68
        $region67: #{tpu_custom_call.1} parent=51 // pred_region
          %429 = vst [vmem:[#allocation2] sm:$0xff] 0.0
          %430 = vst [vmem:[#allocation2 + $0x8] sm:$0xff] 0.0
        $region68: #{tpu_custom_call.1} parent=51 // pred_fallthru
          _
        %v431 = vld [vmem:[%s410] sm:$0xff]
        %v432 = vld [vmem:[%s410 + $0x8] sm:$0xff]
        %v433 = vld [vmem:[%s410 + $0x10] sm:$0xff]
        %v434 = vld [vmem:[%s410 + $0x18] sm:$0xff]
        %v435 = vld [vmem:[%s410 + $0x20] sm:$0xff]
        %v436 = vld [vmem:[%s410 + $0x28] sm:$0xff]
        %v437 = vld [vmem:[%s410 + $0x30] sm:$0xff]
        %v438 = vld [vmem:[%s410 + $0x38] sm:$0xff]
        %v439 = vld [vmem:[%s410 + $0x40] sm:$0xff]
        %v440 = vld [vmem:[%s410 + $0x48] sm:$0xff]
        %v441 = vld [vmem:[%s410 + $0x50] sm:$0xff]
        %v442 = vld [vmem:[%s410 + $0x58] sm:$0xff]
        %v443 = vld [vmem:[%s410 + $0x60] sm:$0xff]
        %v444 = vld [vmem:[%s410 + $0x68] sm:$0xff]
        %v445 = vld [vmem:[%s410 + $0x70] sm:$0xff]
        %v446 = vld [vmem:[%s410 + $0x78] sm:$0xff]
        %v447 = vunpack.c.l.bf16 %v431
        %v448 = vunpack.c.h.bf16 %v431
        %v449 = vunpack.c.l.bf16 %v432
        %v450 = vunpack.c.h.bf16 %v432
        %v451 = vunpack.c.l.bf16 %v433
        %v452 = vunpack.c.h.bf16 %v433
        %v453 = vunpack.c.l.bf16 %v434
        %v454 = vunpack.c.h.bf16 %v434
        %v455 = vunpack.c.l.bf16 %v435
        %v456 = vunpack.c.h.bf16 %v435
        %v457 = vunpack.c.l.bf16 %v436
        %v458 = vunpack.c.h.bf16 %v436
        %v459 = vunpack.c.l.bf16 %v437
        %v460 = vunpack.c.h.bf16 %v437
        %v461 = vunpack.c.l.bf16 %v438
        %v462 = vunpack.c.h.bf16 %v438
        %v463 = vunpack.c.l.bf16 %v439
        %v464 = vunpack.c.h.bf16 %v439
        %v465 = vunpack.c.l.bf16 %v440
        %v466 = vunpack.c.h.bf16 %v440
        %v467 = vunpack.c.l.bf16 %v441
        %v468 = vunpack.c.h.bf16 %v441
        %v469 = vunpack.c.l.bf16 %v442
        %v470 = vunpack.c.h.bf16 %v442
        %v471 = vunpack.c.l.bf16 %v443
        %v472 = vunpack.c.h.bf16 %v443
        %v473 = vunpack.c.l.bf16 %v444
        %v474 = vunpack.c.h.bf16 %v444
        %v475 = vunpack.c.l.bf16 %v445
        %v476 = vunpack.c.h.bf16 %v445
        %v477 = vunpack.c.l.bf16 %v446
        %v478 = vunpack.c.h.bf16 %v446
        %v479 = vld [vmem:[#allocation2] sm:$0xff]
        %v480 = vld [vmem:[#allocation2 + $0x8] sm:$0xff]
        %v481 = vld [vmem:[%s422] sm:$0xff]
        %v482 = vld [vmem:[%s422 + $0x8] sm:$0xff]
        %v483 = vld [vmem:[%s422 + $0x10] sm:$0xff]
        %v484 = vld [vmem:[%s422 + $0x18] sm:$0xff]
        %v485 = vld [vmem:[%s422 + $0x20] sm:$0xff]
        %v486 = vld [vmem:[%s422 + $0x28] sm:$0xff]
        %v487 = vld [vmem:[%s422 + $0x30] sm:$0xff]
        %v488 = vld [vmem:[%s422 + $0x38] sm:$0xff]
        %v489 = vld [vmem:[%s422 + $0x40] sm:$0xff]
        %v490 = vld [vmem:[%s422 + $0x48] sm:$0xff]
        %v491 = vld [vmem:[%s422 + $0x50] sm:$0xff]
        %v492 = vld [vmem:[%s422 + $0x58] sm:$0xff]
        %v493 = vld [vmem:[%s422 + $0x60] sm:$0xff]
        %v494 = vld [vmem:[%s422 + $0x68] sm:$0xff]
        %v495 = vld [vmem:[%s422 + $0x70] sm:$0xff]
        %v496 = vld [vmem:[%s422 + $0x78] sm:$0xff]
        %498 = vset.pattern.permute.xlu0 0
        %499 = vperm.xlu0 %498, %v481
        %v500 = vpop.permute.xlu0 %499
        %503 = vset.pattern.permute.xlu0 0
        %504 = vperm.xlu0 %503, %v482
        %v505 = vpop.permute.xlu0 %504
        %508 = vset.pattern.permute.xlu0 0
        %509 = vperm.xlu0 %508, %v483
        %v510 = vpop.permute.xlu0 %509
        %513 = vset.pattern.permute.xlu0 0
        %514 = vperm.xlu0 %513, %v484
        %v515 = vpop.permute.xlu0 %514
        %518 = vset.pattern.permute.xlu0 0
        %519 = vperm.xlu0 %518, %v485
        %v520 = vpop.permute.xlu0 %519
        %523 = vset.pattern.permute.xlu0 0
        %524 = vperm.xlu0 %523, %v486
        %v525 = vpop.permute.xlu0 %524
        %528 = vset.pattern.permute.xlu0 0
        %529 = vperm.xlu0 %528, %v487
        %v530 = vpop.permute.xlu0 %529
        %533 = vset.pattern.permute.xlu0 0
        %534 = vperm.xlu0 %533, %v488
        %v535 = vpop.permute.xlu0 %534
        %538 = vset.pattern.permute.xlu0 0
        %539 = vperm.xlu0 %538, %v489
        %v540 = vpop.permute.xlu0 %539
        %543 = vset.pattern.permute.xlu0 0
        %544 = vperm.xlu0 %543, %v490
        %v545 = vpop.permute.xlu0 %544
        %548 = vset.pattern.permute.xlu0 0
        %549 = vperm.xlu0 %548, %v491
        %v550 = vpop.permute.xlu0 %549
        %553 = vset.pattern.permute.xlu0 0
        %554 = vperm.xlu0 %553, %v492
        %v555 = vpop.permute.xlu0 %554
        %558 = vset.pattern.permute.xlu0 0
        %559 = vperm.xlu0 %558, %v493
        %v560 = vpop.permute.xlu0 %559
        %563 = vset.pattern.permute.xlu0 0
        %564 = vperm.xlu0 %563, %v494
        %v565 = vpop.permute.xlu0 %564
        %568 = vset.pattern.permute.xlu0 0
        %569 = vperm.xlu0 %568, %v495
        %v570 = vpop.permute.xlu0 %569
        %573 = vset.pattern.permute.xlu0 0
        %574 = vperm.xlu0 %573, %v496
        %v575 = vpop.permute.xlu0 %574
        %v577 = vmul.f32 %v447, %v500
        %v578 = vmul.f32 %v448, %v500
        %v579 = vmul.f32 %v449, %v505
        %v580 = vmul.f32 %v450, %v505
        %v581 = vmul.f32 %v451, %v510
        %v582 = vmul.f32 %v452, %v510
        %v583 = vmul.f32 %v453, %v515
        %v584 = vmul.f32 %v454, %v515
        %v585 = vmul.f32 %v455, %v520
        %v586 = vmul.f32 %v456, %v520
        %v587 = vmul.f32 %v457, %v525
        %v588 = vmul.f32 %v458, %v525
        %v589 = vmul.f32 %v459, %v530
        %v590 = vmul.f32 %v460, %v530
        %v591 = vmul.f32 %v461, %v535
        %v592 = vmul.f32 %v462, %v535
        %v593 = vmul.f32 %v463, %v540
        %v594 = vmul.f32 %v464, %v540
        %v595 = vmul.f32 %v465, %v545
        %v596 = vmul.f32 %v466, %v545
        %v597 = vmul.f32 %v467, %v550
        %v598 = vmul.f32 %v468, %v550
        %v599 = vmul.f32 %v469, %v555
        %v600 = vmul.f32 %v470, %v555
        %v601 = vmul.f32 %v471, %v560
        %v602 = vmul.f32 %v472, %v560
        %v603 = vmul.f32 %v473, %v565
        %v604 = vmul.f32 %v474, %v565
        %v605 = vmul.f32 %v475, %v570
        %v606 = vmul.f32 %v476, %v570
        %v607 = vmul.f32 %v477, %v575
        %v608 = vmul.f32 %v478, %v575
        %v609 = vadd.f32 %v577, %v579
        %v610 = vrot.slane %v609, 4
        %v611 = vadd.f32 %v609, %v610
        %v612 = vrot.slane %v611, 2
        %v613 = vadd.f32 %v611, %v612
        %v614 = vrot.slane %v613, 1
        %v615 = vadd.f32 %v613, %v614
        %v616 = vadd.f32 %v578, %v580
        %v617 = vrot.slane %v616, 4
        %v618 = vadd.f32 %v616, %v617
        %v619 = vrot.slane %v618, 2
        %v620 = vadd.f32 %v618, %v619
        %v621 = vrot.slane %v620, 1
        %v622 = vadd.f32 %v620, %v621
        %v623 = vadd.f32 %v581, %v583
        %v624 = vrot.slane %v623, 4
        %v625 = vadd.f32 %v623, %v624
        %v626 = vrot.slane %v625, 2
        %v627 = vadd.f32 %v625, %v626
        %v628 = vrot.slane %v627, 1
        %v629 = vadd.f32 %v627, %v628
        %v630 = vadd.f32 %v582, %v584
        %v631 = vrot.slane %v630, 4
        %v632 = vadd.f32 %v630, %v631
        %v633 = vrot.slane %v632, 2
        %v634 = vadd.f32 %v632, %v633
        %v635 = vrot.slane %v634, 1
        %v636 = vadd.f32 %v634, %v635
        %v637 = vadd.f32 %v585, %v587
        %v638 = vrot.slane %v637, 4
        %v639 = vadd.f32 %v637, %v638
        %v640 = vrot.slane %v639, 2
        %v641 = vadd.f32 %v639, %v640
        %v642 = vrot.slane %v641, 1
        %v643 = vadd.f32 %v641, %v642
        %v644 = vadd.f32 %v586, %v588
        %v645 = vrot.slane %v644, 4
        %v646 = vadd.f32 %v644, %v645
        %v647 = vrot.slane %v646, 2
        %v648 = vadd.f32 %v646, %v647
        %v649 = vrot.slane %v648, 1
        %v650 = vadd.f32 %v648, %v649
        %v651 = vadd.f32 %v589, %v591
        %v652 = vrot.slane %v651, 4
        %v653 = vadd.f32 %v651, %v652
        %v654 = vrot.slane %v653, 2
        %v655 = vadd.f32 %v653, %v654
        %v656 = vrot.slane %v655, 1
        %v657 = vadd.f32 %v655, %v656
        %v658 = vadd.f32 %v590, %v592
        %v659 = vrot.slane %v658, 4
        %v660 = vadd.f32 %v658, %v659
        %v661 = vrot.slane %v660, 2
        %v662 = vadd.f32 %v660, %v661
        %v663 = vrot.slane %v662, 1
        %v664 = vadd.f32 %v662, %v663
        %v665 = vadd.f32 %v593, %v595
        %v666 = vrot.slane %v665, 4
        %v667 = vadd.f32 %v665, %v666
        %v668 = vrot.slane %v667, 2
        %v669 = vadd.f32 %v667, %v668
        %v670 = vrot.slane %v669, 1
        %v671 = vadd.f32 %v669, %v670
        %v672 = vadd.f32 %v594, %v596
        %v673 = vrot.slane %v672, 4
        %v674 = vadd.f32 %v672, %v673
        %v675 = vrot.slane %v674, 2
        %v676 = vadd.f32 %v674, %v675
        %v677 = vrot.slane %v676, 1
        %v678 = vadd.f32 %v676, %v677
        %v679 = vadd.f32 %v597, %v599
        %v680 = vrot.slane %v679, 4
        %v681 = vadd.f32 %v679, %v680
        %v682 = vrot.slane %v681, 2
        %v683 = vadd.f32 %v681, %v682
        %v684 = vrot.slane %v683, 1
        %v685 = vadd.f32 %v683, %v684
        %v686 = vadd.f32 %v598, %v600
        %v687 = vrot.slane %v686, 4
        %v688 = vadd.f32 %v686, %v687
        %v689 = vrot.slane %v688, 2
        %v690 = vadd.f32 %v688, %v689
        %v691 = vrot.slane %v690, 1
        %v692 = vadd.f32 %v690, %v691
        %v693 = vadd.f32 %v601, %v603
        %v694 = vrot.slane %v693, 4
        %v695 = vadd.f32 %v693, %v694
        %v696 = vrot.slane %v695, 2
        %v697 = vadd.f32 %v695, %v696
        %v698 = vrot.slane %v697, 1
        %v699 = vadd.f32 %v697, %v698
        %v700 = vadd.f32 %v602, %v604
        %v701 = vrot.slane %v700, 4
        %v702 = vadd.f32 %v700, %v701
        %v703 = vrot.slane %v702, 2
        %v704 = vadd.f32 %v702, %v703
        %v705 = vrot.slane %v704, 1
        %v706 = vadd.f32 %v704, %v705
        %v707 = vadd.f32 %v605, %v607
        %v708 = vrot.slane %v707, 4
        %v709 = vadd.f32 %v707, %v708
        %v710 = vrot.slane %v709, 2
        %v711 = vadd.f32 %v709, %v710
        %v712 = vrot.slane %v711, 1
        %v713 = vadd.f32 %v711, %v712
        %v714 = vadd.f32 %v606, %v608
        %v715 = vrot.slane %v714, 4
        %v716 = vadd.f32 %v714, %v715
        %v717 = vrot.slane %v716, 2
        %v718 = vadd.f32 %v716, %v717
        %v719 = vrot.slane %v718, 1
        %v720 = vadd.f32 %v718, %v719
        %vm737 = vcmask 1041409
        %v738 = vsel %vm737, %v629, %v615
        %vm739 = vcmask 1042434
        %v740 = vsel %vm739, %v643, %v738
        %vm741 = vcmask 1043459
        %v742 = vsel %vm741, %v657, %v740
        %vm743 = vcmask 1044484
        %v744 = vsel %vm743, %v671, %v742
        %vm745 = vcmask 1045509
        %v746 = vsel %vm745, %v685, %v744
        %vm747 = vcmask 1046534
        %v748 = vsel %vm747, %v699, %v746
        %vm749 = vcmask 1047559
        %v750 = vsel %vm749, %v713, %v748
        %v751 = vsel %vm737, %v636, %v622
        %v752 = vsel %vm739, %v650, %v751
        %v753 = vsel %vm741, %v664, %v752
        %v754 = vsel %vm743, %v678, %v753
        %v755 = vsel %vm745, %v692, %v754
        %v756 = vsel %vm747, %v706, %v755
        %v757 = vsel %vm749, %v720, %v756
        %v760 = vadd.f32 %v479, %v750
        %v761 = vadd.f32 %v480, %v757
        %762 = vst [vmem:[#allocation2] sm:$0xff] %v760
        %763 = vst [vmem:[#allocation2 + $0x8] sm:$0xff] %v761
        // Predicated region
        $region69: #{tpu_custom_call.1} parent=51 // pred_check
          %p764 = pneg %p425
        $region70: #{tpu_custom_call.1} parent=51 // pred_check_branch
          %766 = sbr.rel (%p764) target = $region72
        $region71: #{tpu_custom_call.1} parent=51 // pred_region
          %v767 = vld [vmem:[#allocation2] sm:$0xff]
          %v768 = vld [vmem:[#allocation2 + $0x8] sm:$0xff]
          %v769 = vld [vmem:[#allocation3] sm:$0xff]
          %v770 = vld [vmem:[#allocation3 + $0x8] sm:$0xff]
          %v771 = vld [vmem:[#allocation3 + $0x10] sm:$0xff]
          %v772 = vld [vmem:[#allocation3 + $0x18] sm:$0xff]
          %v773 = vld [vmem:[#allocation3 + $0x20] sm:$0xff]
          %v774 = vld [vmem:[#allocation3 + $0x28] sm:$0xff]
          %v775 = vld [vmem:[#allocation3 + $0x30] sm:$0xff]
          %v776 = vld [vmem:[#allocation3 + $0x38] sm:$0xff]
          %v777 = vld [vmem:[#allocation3 + $0x40] sm:$0xff]
          %v778 = vld [vmem:[#allocation3 + $0x48] sm:$0xff]
          %v779 = vld [vmem:[#allocation3 + $0x50] sm:$0xff]
          %v780 = vld [vmem:[#allocation3 + $0x58] sm:$0xff]
          %v781 = vld [vmem:[#allocation3 + $0x60] sm:$0xff]
          %v782 = vld [vmem:[#allocation3 + $0x68] sm:$0xff]
          %v783 = vld [vmem:[#allocation3 + $0x70] sm:$0xff]
          %v784 = vld [vmem:[#allocation3 + $0x78] sm:$0xff]
          %v785 = vld [vmem:[#allocation3 + $0x80] sm:$0xff]
          %v786 = vld [vmem:[#allocation3 + $0x88] sm:$0xff]
          %v787 = vld [vmem:[#allocation3 + $0x90] sm:$0xff]
          %v788 = vld [vmem:[#allocation3 + $0x98] sm:$0xff]
          %v789 = vld [vmem:[#allocation3 + $0xa0] sm:$0xff]
          %v790 = vld [vmem:[#allocation3 + $0xa8] sm:$0xff]
          %v791 = vld [vmem:[#allocation3 + $0xb0] sm:$0xff]
          %v792 = vld [vmem:[#allocation3 + $0xb8] sm:$0xff]
          %v793 = vld [vmem:[#allocation3 + $0xc0] sm:$0xff]
          %v794 = vld [vmem:[#allocation3 + $0xc8] sm:$0xff]
          %v795 = vld [vmem:[#allocation3 + $0xd0] sm:$0xff]
          %v796 = vld [vmem:[#allocation3 + $0xd8] sm:$0xff]
          %v797 = vld [vmem:[#allocation3 + $0xe0] sm:$0xff]
          %v798 = vld [vmem:[#allocation3 + $0xe8] sm:$0xff]
          %v799 = vld [vmem:[#allocation3 + $0xf0] sm:$0xff]
          %v800 = vld [vmem:[#allocation3 + $0xf8] sm:$0xff]
          %v801 = vld [vmem:[#allocation3 + $0x100] sm:$0xff]
          %v802 = vld [vmem:[#allocation3 + $0x108] sm:$0xff]
          %v803 = vld [vmem:[#allocation3 + $0x110] sm:$0xff]
          %v804 = vld [vmem:[#allocation3 + $0x118] sm:$0xff]
          %v805 = vld [vmem:[#allocation3 + $0x120] sm:$0xff]
          %v806 = vld [vmem:[#allocation3 + $0x128] sm:$0xff]
          %v807 = vld [vmem:[#allocation3 + $0x130] sm:$0xff]
          %v808 = vld [vmem:[#allocation3 + $0x138] sm:$0xff]
          %v809 = vld [vmem:[#allocation3 + $0x140] sm:$0xff]
          %v810 = vld [vmem:[#allocation3 + $0x148] sm:$0xff]
          %v811 = vld [vmem:[#allocation3 + $0x150] sm:$0xff]
          %v812 = vld [vmem:[#allocation3 + $0x158] sm:$0xff]
          %v813 = vld [vmem:[#allocation3 + $0x160] sm:$0xff]
          %v814 = vld [vmem:[#allocation3 + $0x168] sm:$0xff]
          %v815 = vld [vmem:[#allocation3 + $0x170] sm:$0xff]
          %v816 = vld [vmem:[#allocation3 + $0x178] sm:$0xff]
          %v817 = vld [vmem:[#allocation3 + $0x180] sm:$0xff]
          %v818 = vld [vmem:[#allocation3 + $0x188] sm:$0xff]
          %v819 = vld [vmem:[#allocation3 + $0x190] sm:$0xff]
          %v820 = vld [vmem:[#allocation3 + $0x198] sm:$0xff]
          %v821 = vld [vmem:[#allocation3 + $0x1a0] sm:$0xff]
          %v822 = vld [vmem:[#allocation3 + $0x1a8] sm:$0xff]
          %v823 = vld [vmem:[#allocation3 + $0x1b0] sm:$0xff]
          %v824 = vld [vmem:[#allocation3 + $0x1b8] sm:$0xff]
          %v825 = vld [vmem:[#allocation3 + $0x1c0] sm:$0xff]
          %v826 = vld [vmem:[#allocation3 + $0x1c8] sm:$0xff]
          %v827 = vld [vmem:[#allocation3 + $0x1d0] sm:$0xff]
          %v828 = vld [vmem:[#allocation3 + $0x1d8] sm:$0xff]
          %v829 = vld [vmem:[#allocation3 + $0x1e0] sm:$0xff]
          %v830 = vld [vmem:[#allocation3 + $0x1e8] sm:$0xff]
          %v831 = vld [vmem:[#allocation3 + $0x1f0] sm:$0xff]
          %v832 = vld [vmem:[#allocation3 + $0x1f8] sm:$0xff]
          %v833 = vld [vmem:[%s3] sm:$0x3]
          %v835 = vlaneseq
          %v836 = vshrl.u32 %v835, 7
          %v837 = vsub.s32 0, %v836
          %v838 = vrot.slane %v833, %v837
          %v839 = vlaneseq
          %v840 = vshrl.u32 %v839, 7
          %v841 = vsub.s32 1, %v840
          %v842 = vrot.slane %v833, %v841
          %845 = vmatprep.subr.mxu0 %v770
          %846 = vmatpush1.msra.mxu0 %v769
          %847 = vmatprep.subr.mxu0 %v772
          %848 = vmatpush1.msra.mxu0 %v771
          %849 = vmatprep.subr.mxu0 %v774
          %850 = vmatpush1.msra.mxu0 %v773
          %851 = vmatprep.subr.mxu0 %v776
          %852 = vmatpush1.msra.mxu0 %v775
          %853 = vmatprep.subr.mxu0 %v778
          %854 = vmatpush1.msra.mxu0 %v777
          %855 = vmatprep.subr.mxu0 %v780
          %856 = vmatpush1.msra.mxu0 %v779
          %857 = vmatprep.subr.mxu0 %v782
          %858 = vmatpush1.msra.mxu0 %v781
          %859 = vmatprep.subr.mxu0 %v784
          %860 = vmatpush1.msra.mxu0 %v783
          %861 = vmatprep.subr.mxu0 %v786
          %862 = vmatpush1.msra.mxu0 %v785
          %863 = vmatprep.subr.mxu0 %v788
          %864 = vmatpush1.msra.mxu0 %v787
          %865 = vmatprep.subr.mxu0 %v790
          %866 = vmatpush1.msra.mxu0 %v789
          %867 = vmatprep.subr.mxu0 %v792
          %868 = vmatpush1.msra.mxu0 %v791
          %869 = vmatprep.subr.mxu0 %v794
          %870 = vmatpush1.msra.mxu0 %v793
          %871 = vmatprep.subr.mxu0 %v796
          %872 = vmatpush1.msra.mxu0 %v795
          %873 = vmatprep.subr.mxu0 %v798
          %874 = vmatpush1.msra.mxu0 %v797
          %875 = vmatprep.subr.mxu0 %v800
          %876 = vmatpush1.msra.mxu0 %v799
          %877 = vmatprep.subr.mxu0 %v802
          %878 = vmatpush1.msra.mxu0 %v801
          %879 = vmatprep.subr.mxu0 %v804
          %880 = vmatpush1.msra.mxu0 %v803
          %881 = vmatprep.subr.mxu0 %v806
          %882 = vmatpush1.msra.mxu0 %v805
          %883 = vmatprep.subr.mxu0 %v808
          %884 = vmatpush1.msra.mxu0 %v807
          %885 = vmatprep.subr.mxu0 %v810
          %886 = vmatpush1.msra.mxu0 %v809
          %887 = vmatprep.subr.mxu0 %v812
          %888 = vmatpush1.msra.mxu0 %v811
          %889 = vmatprep.subr.mxu0 %v814
          %890 = vmatpush1.msra.mxu0 %v813
          %891 = vmatprep.subr.mxu0 %v816
          %892 = vmatpush1.msra.mxu0 %v815
          %893 = vmatprep.subr.mxu0 %v818
          %894 = vmatpush1.msra.mxu0 %v817
          %895 = vmatprep.subr.mxu0 %v820
          %896 = vmatpush1.msra.mxu0 %v819
          %897 = vmatprep.subr.mxu0 %v822
          %898 = vmatpush1.msra.mxu0 %v821
          %899 = vmatprep.subr.mxu0 %v824
          %900 = vmatpush1.msra.mxu0 %v823
          %901 = vmatprep.subr.mxu0 %v826
          %902 = vmatpush1.msra.mxu0 %v825
          %903 = vmatprep.subr.mxu0 %v828
          %904 = vmatpush1.msra.mxu0 %v827
          %905 = vmatprep.subr.mxu0 %v830
          %906 = vmatpush1.msra.mxu0 %v829
          %907 = vmatprep.subr.mxu0 %v832
          %908 = vmatpush1.msra.mxu0 %v831
          %909 = vmatprep.mubr.f32.mxu0 %v768
          %910 = vmatmul.mubr.f32.gmra.mrb[0].mxu0 %v767
          %v911 = vpop.f32.mrb[0].mxu0
          %v912 = vadd.f32 %v838, %v911
          %v913 = vpop.f32.mrb[0].mxu0
          %v914 = vadd.f32 %v842, %v913
          %915 = vdwg.mxu0
          %v916 = vtanh.pop %v912
          %v917 = vtanh.pop %v914
          %v918 = vld [vmem:[#allocation6] sm:$0xff]
          %v919 = vld [vmem:[#allocation6 + $0x8] sm:$0xff]
          %v920 = vld [vmem:[#allocation6 + $0x10] sm:$0xff]
          %v921 = vld [vmem:[#allocation6 + $0x18] sm:$0xff]
          %v922 = vld [vmem:[#allocation6 + $0x20] sm:$0xff]
          %v923 = vld [vmem:[#allocation6 + $0x28] sm:$0xff]
          %v924 = vld [vmem:[#allocation6 + $0x30] sm:$0xff]
          %v925 = vld [vmem:[#allocation6 + $0x38] sm:$0xff]
          %v926 = vld [vmem:[#allocation6 + $0x40] sm:$0xff]
          %v927 = vld [vmem:[#allocation6 + $0x48] sm:$0xff]
          %v928 = vld [vmem:[#allocation6 + $0x50] sm:$0xff]
          %v929 = vld [vmem:[#allocation6 + $0x58] sm:$0xff]
          %v930 = vld [vmem:[#allocation6 + $0x60] sm:$0xff]
          %v931 = vld [vmem:[#allocation6 + $0x68] sm:$0xff]
          %v932 = vld [vmem:[#allocation6 + $0x70] sm:$0xff]
          %v933 = vld [vmem:[#allocation6 + $0x78] sm:$0xff]
          %v934 = vld [vmem:[#allocation6 + $0x80] sm:$0xff]
          %v935 = vld [vmem:[#allocation6 + $0x88] sm:$0xff]
          %v936 = vld [vmem:[#allocation6 + $0x90] sm:$0xff]
          %v937 = vld [vmem:[#allocation6 + $0x98] sm:$0xff]
          %v938 = vld [vmem:[#allocation6 + $0xa0] sm:$0xff]
          %v939 = vld [vmem:[#allocation6 + $0xa8] sm:$0xff]
          %v940 = vld [vmem:[#allocation6 + $0xb0] sm:$0xff]
          %v941 = vld [vmem:[#allocation6 + $0xb8] sm:$0xff]
          %v942 = vld [vmem:[#allocation6 + $0xc0] sm:$0xff]
          %v943 = vld [vmem:[#allocation6 + $0xc8] sm:$0xff]
          %v944 = vld [vmem:[#allocation6 + $0xd0] sm:$0xff]
          %v945 = vld [vmem:[#allocation6 + $0xd8] sm:$0xff]
          %v946 = vld [vmem:[#allocation6 + $0xe0] sm:$0xff]
          %v947 = vld [vmem:[#allocation6 + $0xe8] sm:$0xff]
          %v948 = vld [vmem:[#allocation6 + $0xf0] sm:$0xff]
          %v949 = vld [vmem:[#allocation6 + $0xf8] sm:$0xff]
          %v950 = vld [vmem:[%s5] sm:$0x1]
          %v952 = vlaneseq
          %v953 = vshrl.u32 %v952, 7
          %v954 = vsub.s32 0, %v953
          %v955 = vrot.slane %v950, %v954
          %957 = vmatprep.subr.mxu0 0.0
          %958 = vmatpush1.msra.mxu0 %v918
          %959 = vmatprep.subr.mxu0 0.0
          %960 = vmatpush1.msra.mxu0 %v919
          %961 = vmatprep.subr.mxu0 0.0
          %962 = vmatpush1.msra.mxu0 %v920
          %963 = vmatprep.subr.mxu0 0.0
          %964 = vmatpush1.msra.mxu0 %v921
          %965 = vmatprep.subr.mxu0 0.0
          %966 = vmatpush1.msra.mxu0 %v922
          %967 = vmatprep.subr.mxu0 0.0
          %968 = vmatpush1.msra.mxu0 %v923
          %969 = vmatprep.subr.mxu0 0.0
          %970 = vmatpush1.msra.mxu0 %v924
          %971 = vmatprep.subr.mxu0 0.0
          %972 = vmatpush1.msra.mxu0 %v925
          %973 = vmatprep.subr.mxu0 0.0
          %974 = vmatpush1.msra.mxu0 %v926
          %975 = vmatprep.subr.mxu0 0.0
          %976 = vmatpush1.msra.mxu0 %v927
          %977 = vmatprep.subr.mxu0 0.0
          %978 = vmatpush1.msra.mxu0 %v928
          %979 = vmatprep.subr.mxu0 0.0
          %980 = vmatpush1.msra.mxu0 %v929
          %981 = vmatprep.subr.mxu0 0.0
          %982 = vmatpush1.msra.mxu0 %v930
          %983 = vmatprep.subr.mxu0 0.0
          %984 = vmatpush1.msra.mxu0 %v931
          %985 = vmatprep.subr.mxu0 0.0
          %986 = vmatpush1.msra.mxu0 %v932
          %987 = vmatprep.subr.mxu0 0.0
          %988 = vmatpush1.msra.mxu0 %v933
          %989 = vmatprep.subr.mxu0 0.0
          %990 = vmatpush1.msra.mxu0 %v934
          %991 = vmatprep.subr.mxu0 0.0
          %992 = vmatpush1.msra.mxu0 %v935
          %993 = vmatprep.subr.mxu0 0.0
          %994 = vmatpush1.msra.mxu0 %v936
          %995 = vmatprep.subr.mxu0 0.0
          %996 = vmatpush1.msra.mxu0 %v937
          %997 = vmatprep.subr.mxu0 0.0
          %998 = vmatpush1.msra.mxu0 %v938
          %999 = vmatprep.subr.mxu0 0.0
          %1000 = vmatpush1.msra.mxu0 %v939
          %1001 = vmatprep.subr.mxu0 0.0
          %1002 = vmatpush1.msra.mxu0 %v940
          %1003 = vmatprep.subr.mxu0 0.0
          %1004 = vmatpush1.msra.mxu0 %v941
          %1005 = vmatprep.subr.mxu0 0.0
          %1006 = vmatpush1.msra.mxu0 %v942
          %1007 = vmatprep.subr.mxu0 0.0
          %1008 = vmatpush1.msra.mxu0 %v943
          %1009 = vmatprep.subr.mxu0 0.0
          %1010 = vmatpush1.msra.mxu0 %v944
          %1011 = vmatprep.subr.mxu0 0.0
          %1012 = vmatpush1.msra.mxu0 %v945
          %1013 = vmatprep.subr.mxu0 0.0
          %1014 = vmatpush1.msra.mxu0 %v946
          %1015 = vmatprep.subr.mxu0 0.0
          %1016 = vmatpush1.msra.mxu0 %v947
          %1017 = vmatprep.subr.mxu0 0.0
          %1018 = vmatpush1.msra.mxu0 %v948
          %1019 = vmatprep.subr.mxu0 0.0
          %1020 = vmatpush1.msra.mxu0 %v949
          %1021 = vmatprep.mubr.f32.mxu0 %v917
          %1022 = vmatmul.mubr.f32.gmra.mrb[0].mxu0 %v916
          %v1023 = vpop.f32.mrb[0].mxu0
          %v1024 = vadd.f32 %v955, %v1023
          %v1025 = vpop.f32.mrb[0].mxu0
          %1026 = vdwg.mxu0
          %v1027 = vmul.f32 %v1024, 0.01
          %v1028 = vmax.f32 %v1024, %v1027
          %v1029 = vld [vmem:[#allocation8] sm:$0xff]
          %v1030 = vld [vmem:[#allocation8 + $0x8] sm:$0xff]
          %v1031 = vld [vmem:[#allocation8 + $0x10] sm:$0xff]
          %v1032 = vld [vmem:[#allocation8 + $0x18] sm:$0xff]
          %v1033 = vld [vmem:[#allocation8 + $0x20] sm:$0xff]
          %v1034 = vld [vmem:[#allocation8 + $0x28] sm:$0xff]
          %v1035 = vld [vmem:[#allocation8 + $0x30] sm:$0xff]
          %v1036 = vld [vmem:[#allocation8 + $0x38] sm:$0xff]
          %v1037 = vld [vmem:[#allocation8 + $0x40] sm:$0xff]
          %v1038 = vld [vmem:[#allocation8 + $0x48] sm:$0xff]
          %v1039 = vld [vmem:[#allocation8 + $0x50] sm:$0xff]
          %v1040 = vld [vmem:[#allocation8 + $0x58] sm:$0xff]
          %v1041 = vld [vmem:[#allocation8 + $0x60] sm:$0xff]
          %v1042 = vld [vmem:[#allocation8 + $0x68] sm:$0xff]
          %v1043 = vld [vmem:[#allocation8 + $0x70] sm:$0xff]
          %v1044 = vld [vmem:[#allocation8 + $0x78] sm:$0xff]
          %v1045 = vld [vmem:[%s7] sm:$0x1]
          %v1047 = vlaneseq
          %v1048 = vshrl.u32 %v1047, 7
          %v1049 = vsub.s32 0, %v1048
          %v1050 = vrot.slane %v1045, %v1049
          %1052 = vmatprep.subr.mxu0 0.0
          %1053 = vmatpush1.msra.mxu0 %v1029
          %1054 = vmatprep.subr.mxu0 0.0
          %1055 = vmatpush1.msra.mxu0 %v1030
          %1056 = vmatprep.subr.mxu0 0.0
          %1057 = vmatpush1.msra.mxu0 %v1031
          %1058 = vmatprep.subr.mxu0 0.0
          %1059 = vmatpush1.msra.mxu0 %v1032
          %1060 = vmatprep.subr.mxu0 0.0
          %1061 = vmatpush1.msra.mxu0 %v1033
          %1062 = vmatprep.subr.mxu0 0.0
          %1063 = vmatpush1.msra.mxu0 %v1034
          %1064 = vmatprep.subr.mxu0 0.0
          %1065 = vmatpush1.msra.mxu0 %v1035
          %1066 = vmatprep.subr.mxu0 0.0
          %1067 = vmatpush1.msra.mxu0 %v1036
          %1068 = vmatprep.subr.mxu0 0.0
          %1069 = vmatpush1.msra.mxu0 %v1037
          %1070 = vmatprep.subr.mxu0 0.0
          %1071 = vmatpush1.msra.mxu0 %v1038
          %1072 = vmatprep.subr.mxu0 0.0
          %1073 = vmatpush1.msra.mxu0 %v1039
          %1074 = vmatprep.subr.mxu0 0.0
          %1075 = vmatpush1.msra.mxu0 %v1040
          %1076 = vmatprep.subr.mxu0 0.0
          %1077 = vmatpush1.msra.mxu0 %v1041
          %1078 = vmatprep.subr.mxu0 0.0
          %1079 = vmatpush1.msra.mxu0 %v1042
          %1080 = vmatprep.subr.mxu0 0.0
          %1081 = vmatpush1.msra.mxu0 %v1043
          %1082 = vmatprep.subr.mxu0 0.0
          %1083 = vmatpush1.msra.mxu0 %v1044
          %1084 = vmatprep.subr.mxu0 0.0
          %1085 = vmatpush1.msra.mxu0 0.0
          %1086 = vmatprep.subr.mxu0 0.0
          %1087 = vmatpush1.msra.mxu0 0.0
          %1088 = vmatprep.subr.mxu0 0.0
          %1089 = vmatpush1.msra.mxu0 0.0
          %1090 = vmatprep.subr.mxu0 0.0
          %1091 = vmatpush1.msra.mxu0 0.0
          %1092 = vmatprep.subr.mxu0 0.0
          %1093 = vmatpush1.msra.mxu0 0.0
          %1094 = vmatprep.subr.mxu0 0.0
          %1095 = vmatpush1.msra.mxu0 0.0
          %1096 = vmatprep.subr.mxu0 0.0
          %1097 = vmatpush1.msra.mxu0 0.0
          %1098 = vmatprep.subr.mxu0 0.0
          %1099 = vmatpush1.msra.mxu0 0.0
          %1100 = vmatprep.subr.mxu0 0.0
          %1101 = vmatpush1.msra.mxu0 0.0
          %1102 = vmatprep.subr.mxu0 0.0
          %1103 = vmatpush1.msra.mxu0 0.0
          %1104 = vmatprep.subr.mxu0 0.0
          %1105 = vmatpush1.msra.mxu0 0.0
          %1106 = vmatprep.subr.mxu0 0.0
          %1107 = vmatpush1.msra.mxu0 0.0
          %1108 = vmatprep.subr.mxu0 0.0
          %1109 = vmatpush1.msra.mxu0 0.0
          %1110 = vmatprep.subr.mxu0 0.0
          %1111 = vmatpush1.msra.mxu0 0.0
          %1112 = vmatprep.subr.mxu0 0.0
          %1113 = vmatpush1.msra.mxu0 0.0
          %1114 = vmatprep.subr.mxu0 0.0
          %1115 = vmatpush1.msra.mxu0 0.0
          %1116 = vmatprep.mubr.f32.mxu0 0.0
          %1117 = vmatmul.mubr.f32.gmra.mrb[0].mxu0 %v1028
          %v1118 = vpop.f32.mrb[0].mxu0
          %v1119 = vadd.f32 %v1050, %v1118
          %v1120 = vpop.f32.mrb[0].mxu0
          %1121 = vdwg.mxu0
          %1122 = vst [vmem:[%s399] sm:$0xff] %v1119
        $region72: #{tpu_custom_call.1} parent=51 // pred_fallthru
          _
        %s1123 = sand.u32 %s226, 1
        %s1124 = scalar_lea.sflag [#allocation5], %s1123
        %s1125 = sand.u32 %s226, 1
        %s1126 = smul.addr %s1125, 8
        %s1127 = scalar_lea.vmem [#allocation9], %s1126
        // Predicated region
        $region73: #{tpu_custom_call.1} parent=51 // pred_check
          %p1128 = pneg %p236
        $region74: #{tpu_custom_call.1} parent=51 // pred_check_branch
          %1130 = sbr.rel (%p1128) target = $region76
        $region75: #{tpu_custom_call.1} parent=51 // pred_region
          %s1132 = ssub.s32 128, 128
          %1133 = vsyncadd %s1124, %s1132
          %s1134 = smul.addr %s28, 128
          %s1135 = scalar_lea.hbm %s8, %s1134
          %s1137 = sshll.u32 %s1127, 4
          %s1138 = int_to_ptr.vmem [resolvable:$true] %s1137
          %1140 = dma.vmem_to_hbm [thread:$0]  %s1138, 128, %s1135, %s1124
        $region76: #{tpu_custom_call.1} parent=51 // pred_fallthru
          _
      $region52: #{tpu_custom_call.1} parent=5 // pred_fallthru
        _
      %p1141 = scmp.le.s32.totalorder 2, %s19
      // Predicated region
      $region77: #{tpu_custom_call.1} parent=5 // pred_check
        %p1142 = pneg %p1141
      $region78: #{tpu_custom_call.1} parent=5 // pred_check_branch
        %1144 = sbr.rel (%p1142) target = $region80
      $region79: #{tpu_custom_call.1} parent=5 // pred_region
        %s1145 = ssub.s32 %s19, 2
        // Predicated region
        $region81: #{tpu_custom_call.1} parent=79 // pred_check
          %p1146 = pneg %p242
        $region82: #{tpu_custom_call.1} parent=79 // pred_check_branch
          %1148 = sbr.rel (%p1146) target = $region84
        $region83: #{tpu_custom_call.1} parent=79 // pred_region
          %s1149 = sand.u32 %s227, 1
          %s1150 = scalar_lea.sflag [#allocation5], %s1149
          %s1151 = sand.u32 %s227, 1
          %s1152 = smul.addr %s1151, 8
          %s1153 = scalar_lea.vmem [#allocation9], %s1152
          %1154 = dma.done %s1150, 128
        $region84: #{tpu_custom_call.1} parent=79 // pred_fallthru
          _
      $region80: #{tpu_custom_call.1} parent=5 // pred_fallthru
        _
    $region6: #{tpu_custom_call.1} parent=1 // loop_footer
      %s23 = sadd.s32 1, %s19
    $region7: #{tpu_custom_call.1} parent=1 // loop_footer_branch
      %18 = sbr.rel target = $region3
    $region8: #{tpu_custom_call.1} parent=1 // loop_exit
      _
    %1155 = vsyncpa [#allocation4], 1
    %s1156 = scalar_lea.sflag [#allocation4], 1
    %1157 = vsyncpa %s1156, 1
    %1158 = vsyncpa [#allocation7], 1
    %1159 = vsyncpa [#allocation5], 1
    %s1160 = scalar_lea.sflag [#allocation5], 1
    %1161 = vsyncpa %s1160, 1

</llo_original>
